<compile_context>
chip_gen: v5e
topology: v5e:2x2
jax: 0.10.0
libtpu: 0.0.40
codegen_flags: <defaults>
</compile_context>

<pallas_src>
import jax
import jax.numpy as jnp
from jax import lax
from jax.experimental import pallas as pl
from jax.experimental.pallas import tpu as pltpu


def linear_kernel(x_ref, w_ref, b_ref, o_ref):
    """One batch tile, transposed layout: o[OUT, TB] = W @ x.T + b."""
    x = x_ref[...]                                   # [TB, IN]   (VMEM)
    w = w_ref[...]                                   # [OUT, IN]  (VMEM, PyTorch layout)
    b = b_ref[...]                                   # [OUT, 1]   (VMEM)
    # Contract dim 1 of W with dim 1 of x (== W @ x.T) on the MXU, f32 acc.
    # Result is [OUT, TB]: batch on the lane axis -> unmasked, lane-dense vst.
    acc = lax.dot_general(
        w, x,
        dimension_numbers=(((1,), (1,)), ((), ())),
        preferred_element_type=jnp.float32,
    )                                                # [OUT, TB]
    o_ref[...] = (acc + b).astype(o_ref.dtype)       # [OUT,1] broadcasts over lanes


def _pick_batch_tile(batch: int) -> int:
    """Batch tile TB.

    Constraints (the (8,128) rule on both specs):
      * x block (TB, IN):  TB on the sublane axis -> TB % 8 == 0 or TB == B.
      * out block (OUT, TB): TB on the lane axis  -> TB % 128 == 0 or TB == B.
    So TB is either the whole (small) batch, or a multiple of 128 used with a
    pl.cdiv grid (trailing partial block is masked by Pallas).

    VMEM budget (padded layout!): one x buffer is TB * 128 lanes * 4 B, i.e.
    1 MiB at TB=2048; double-buffered x + out + weight stays well under the
    v5e 16 MiB scoped-VMEM default and v7x's 32 MiB default / 64 MiB physical.
    """
    TB_MAX = 2048
    if batch >= 256:
        # >=2 grid steps (feeds both v7x TensorCores), capped for VMEM.
        return min(TB_MAX, max(128, 128 * (batch // 256)))
    # Small batch: one whole-array block (legal: equals the full dim).
    return batch


def linear_forward(x, weight, bias):
    """y = x @ weight.T + bias   (PyTorch nn.Linear semantics).

    x:      [B, IN]   float32
    weight: [OUT, IN] float32  (PyTorch nn.Linear layout, used directly)
    bias:   [OUT]     float32
    returns [B, OUT]  float32
    """
    B, IN = x.shape
    OUT = weight.shape[0]
    TB = _pick_batch_tile(B)
    bias2d = bias.reshape(OUT, 1)  # lane-broadcastable against [OUT, TB]

    out_t = pl.pallas_call(
        linear_kernel,
        out_shape=jax.ShapeDtypeStruct((OUT, B), jnp.float32),
        grid=(pl.cdiv(B, TB),),
        in_specs=[
            pl.BlockSpec((TB, IN), lambda i: (i, 0),
                         memory_space=pltpu.MemorySpace.VMEM),
            pl.BlockSpec((OUT, IN), lambda i: (0, 0),
                         memory_space=pltpu.MemorySpace.VMEM),
            pl.BlockSpec((OUT, 1), lambda i: (0, 0),
                         memory_space=pltpu.MemorySpace.VMEM),
        ],
        out_specs=pl.BlockSpec((OUT, TB), lambda i: (0, i),
                               memory_space=pltpu.MemorySpace.VMEM),
        compiler_params=pltpu.CompilerParams(
            dimension_semantics=("parallel",),
        ),
        cost_estimate=pl.CostEstimate(
            flops=2 * B * IN * OUT,
            bytes_accessed=4 * (B * IN + B * OUT + OUT * IN + OUT),
            transcendentals=0,
        ),
    )(x, weight, bias2d)

    # Tiny [OUT, B] -> [B, OUT] transpose in the wrapper (layout plumbing).
    return out_t.T


if __name__ == "__main__":
    key = jax.random.PRNGKey(0)
    kx, kw, kb = jax.random.split(key, 3)

    B, IN, OUT = 64, 10, 2  # small demo batch; tiling logic also handles big B

    # Deterministic synthetic parameters (same shapes as nn.Linear(10, 2)).
    x = jax.random.normal(kx, (B, IN), dtype=jnp.float32)
    weight = jax.random.normal(kw, (OUT, IN), dtype=jnp.float32) * 0.1
    bias = jax.random.normal(kb, (OUT,), dtype=jnp.float32) * 0.1

    y = jax.block_until_ready(linear_forward(x, weight, bias))

    # Sanity check against plain-JAX reference.
    ref = x @ weight.T + bias
    assert y.shape == (B, OUT)
    assert jnp.allclose(y, ref, atol=1e-5, rtol=1e-5)

    print("KERNEL_OK")
</pallas_src>

<mosaic_0001>
module attributes {stable_mosaic.version = 11 : i64} {
  func.func @linear_kernel(%arg0: i32, %arg1: memref<64x10xf32, #tpu.memory_space<vmem>>, %arg2: memref<2x10xf32, #tpu.memory_space<vmem>>, %arg3: memref<2x1xf32, #tpu.memory_space<vmem>>, %arg4: memref<2x64xf32, #tpu.memory_space<vmem>>) attributes {dimension_semantics = [#tpu.dimension_semantics<parallel>], iteration_bounds = array<i64: 1>, scalar_prefetch = 0 : i64, scratch_operands = 0 : i64, tpu.core_type = #tpu.core_type<tc>, window_params = [{transform_indices = @transform_0, window_bounds = array<i64: 64, 10>}, {pipeline_mode = #tpu.pipeline_mode<synchronous>, transform_indices = @transform_1, window_bounds = array<i64: 2, 10>}, {pipeline_mode = #tpu.pipeline_mode<synchronous>, transform_indices = @transform_2, window_bounds = array<i64: 2, 1>}, {transform_indices = @transform_3, window_bounds = array<i64: 2, 64>}]} {
    %c0 = arith.constant 0 : index
    %c0_0 = arith.constant 0 : index
    %0 = vector.load %arg1[%c0, %c0_0] : memref<64x10xf32, #tpu.memory_space<vmem>>, vector<64x10xf32>
    %c0_1 = arith.constant 0 : index
    %c0_2 = arith.constant 0 : index
    %1 = vector.load %arg2[%c0_1, %c0_2] : memref<2x10xf32, #tpu.memory_space<vmem>>, vector<2x10xf32>
    %c0_3 = arith.constant 0 : index
    %c0_4 = arith.constant 0 : index
    %2 = vector.load %arg3[%c0_3, %c0_4] : memref<2x1xf32, #tpu.memory_space<vmem>>, vector<2x1xf32>
    %cst = arith.constant dense<0.000000e+00> : vector<2x64xf32>
    %3 = tpu.matmul %1, %0, %cst {dimension_numbers = #tpu.dot_dimension_numbers<[1], [1], [0], [0], [0, 0, 1, 0], [], []>} : vector<2x10xf32>, vector<64x10xf32>, vector<2x64xf32> -> vector<2x64xf32>
    %4 = vector.broadcast %2 : vector<2x1xf32> to vector<2x64xf32>
    %5 = arith.addf %3, %4 : vector<2x64xf32>
    %c0_5 = arith.constant 0 : index
    %c0_6 = arith.constant 0 : index
    %6 = vector.load %arg4[%c0_5, %c0_6] : memref<2x64xf32, #tpu.memory_space<vmem>>, vector<2x64xf32>
    tpu.vector_store %arg4[%c0_5, %c0_6], %5 {strides = array<i32>} : memref<2x64xf32, #tpu.memory_space<vmem>>, vector<2x64xf32>,
    return
  }
  func.func @transform_0(%arg0: i32) -> (i32, i32) {
    %c0_i32 = arith.constant 0 : i32
    %c0_i32_0 = arith.constant 0 : i32
    return %arg0, %c0_i32 : i32, i32
  }
  func.func @transform_1(%arg0: i32) -> (i32, i32) {
    %c0_i32 = arith.constant 0 : i32
    %c0_i32_0 = arith.constant 0 : i32
    %c0_i32_1 = arith.constant 0 : i32
    return %c0_i32, %c0_i32_0 : i32, i32
  }
  func.func @transform_2(%arg0: i32) -> (i32, i32) {
    %c0_i32 = arith.constant 0 : i32
    %c0_i32_0 = arith.constant 0 : i32
    %c0_i32_1 = arith.constant 0 : i32
    return %c0_i32, %c0_i32_0 : i32, i32
  }
  func.func @transform_3(%arg0: i32) -> (i32, i32) {
    %c0_i32 = arith.constant 0 : i32
    %c0_i32_0 = arith.constant 0 : i32
    return %c0_i32, %arg0 : i32, i32
  }
}

</mosaic_0001>

<llo_original>
// kernel: tpu_custom_call.1
$region0: #{tpu_custom_call.1}
  #allocation0 [shape = 'u32[]', space=smem, size = 0x4, offset = 0x4, fixed_abs, tag = 'smem constant byte address 0x4 - core index']
  #allocation1 [shape = 'u32[72,128]{1,0:T(1,128)}', space=vmem, size = 0x9000, scoped, tag = 'internal scratch']
  %s0 = inlined_call_operand.vmem [shape: f32[64,10], index: 0, kind: input, shape index: {}]
  %s1 = inlined_call_operand.vmem [shape: f32[2,10], index: 1, kind: input, shape index: {}]
  %s2 = inlined_call_operand.vmem [shape: f32[2,1], index: 2, kind: input, shape index: {}]
  %s3 = inlined_call_operand.hbm [shape: f32[2,64], index: 3, kind: output, shape index: {}]
  %s4 = sld [smem:[#allocation0]]
  $region22: #{tpu_custom_call.1} parent=0
    _
  %s6 = ssub.s32 1, %s4
  %s7 = scalar_select 0, %s6, %s4
  $region1: #{tpu_custom_call.1} parent=0
    #allocation2 [shape = 'u8[1024]{0}', space=vmem, size = 0x400, scoped, tag = 'output window, operand 0, single buffered']
    #allocation3 [shape = 's32[1]{0}', space=sflag, size = 0x4, scoped, tag = 'scoped memory for tpu_custom_call.1']
    %8 = vsyncpa [#allocation3], 0
    // Predicated region
    $region2: #{tpu_custom_call.1} parent=1 // pred_check
      _
    $region3: #{tpu_custom_call.1} parent=1 // pred_check_branch
      %10 = sbr.rel (0) target = $region5
    $region4: #{tpu_custom_call.1} parent=1 // pred_region
      _
    $region5: #{tpu_custom_call.1} parent=1 // pred_fallthru
      _
    // Predicated region
    $region6: #{tpu_custom_call.1} parent=1 // pred_check
      _
    $region7: #{tpu_custom_call.1} parent=1 // pred_check_branch
      %12 = sbr.rel (0) target = $region9
    $region8: #{tpu_custom_call.1} parent=1 // pred_region
      _
    $region9: #{tpu_custom_call.1} parent=1 // pred_fallthru
      _
    // Predicated region
    $region10: #{tpu_custom_call.1} parent=1 // pred_check
      _
    $region11: #{tpu_custom_call.1} parent=1 // pred_check_branch
      %14 = sbr.rel (0) target = $region13
    $region12: #{tpu_custom_call.1} parent=1 // pred_region
      _
    $region13: #{tpu_custom_call.1} parent=1 // pred_fallthru
      _
    %v15 = vld [vmem:[%s0] sm:$0xff]
    %v16 = vld [vmem:[%s0 + $0x8] sm:$0xff]
    %v17 = vld [vmem:[%s0 + $0x10] sm:$0xff]
    %v18 = vld [vmem:[%s0 + $0x18] sm:$0xff]
    %v19 = vld [vmem:[%s0 + $0x20] sm:$0xff]
    %v20 = vld [vmem:[%s0 + $0x28] sm:$0xff]
    %v21 = vld [vmem:[%s0 + $0x30] sm:$0xff]
    %v22 = vld [vmem:[%s0 + $0x38] sm:$0xff]
    %v23 = vld [vmem:[%s1] sm:$0x3]
    %v24 = vld [vmem:[%s2] sm:$0x3]
    %26 = vset.pattern.permute.xlu0 0
    %27 = vperm.xlu0 %26, %v24
    %v28 = vpop.permute.xlu0 %27
    %vm30 = vcmask 80896
    %v32 = vsel %vm30, %v23, 0
    %v35 = vsel %vm30, %v15, 0
    %v38 = vsel %vm30, %v16, 0
    %v41 = vsel %vm30, %v17, 0
    %v44 = vsel %vm30, %v18, 0
    %v47 = vsel %vm30, %v19, 0
    %v50 = vsel %vm30, %v20, 0
    %v53 = vsel %vm30, %v21, 0
    %v56 = vsel %vm30, %v22, 0
    %58 = vmatpush.xpose.msra.mxu0 0.0
    %59 = vmatpush.xpose.msra.mxu0 0.0
    %60 = vmatpush.xpose.msra.mxu0 0.0
    %61 = vmatpush.xpose.msra.mxu0 0.0
    %62 = vmatpush.xpose.msra.mxu0 0.0
    %63 = vmatpush.xpose.msra.mxu0 0.0
    %64 = vmatpush.xpose.msra.mxu0 0.0
    %65 = vmatpush.xpose.msra.mxu0 0.0
    %66 = vmatpush.xpose.msra.mxu0 %v56
    %67 = vmatpush.xpose.msra.mxu0 %v53
    %68 = vmatpush.xpose.msra.mxu0 %v50
    %69 = vmatpush.xpose.msra.mxu0 %v47
    %70 = vmatpush.xpose.msra.mxu0 %v44
    %71 = vmatpush.xpose.msra.mxu0 %v41
    %72 = vmatpush.xpose.msra.mxu0 %v38
    %73 = vmatpush.xpose.msra.mxu0 %v35
    %74 = vmatmul.f32.gmra.mxu0 %v32
    %v75 = vpop.f32.mrf.mxu0
    %v76 = vadd.f32 %v28, %v75
    %77 = vdwg.mxu0
    %vm78 = vcmask 517120
    %79 = vst.msk [vmem:[#allocation2] sm:$0x3] %vm78, %v76
    // Predicated region
    $region14: #{tpu_custom_call.1} parent=1 // pred_check
      _
    $region15: #{tpu_custom_call.1} parent=1 // pred_check_branch
      %81 = sbr.rel (0) target = $region17
    $region16: #{tpu_custom_call.1} parent=1 // pred_region
      %83 = vsyncadd [#allocation3], 0
      %s85 = sshll.u32 [#allocation2], 4
      %s86 = int_to_ptr.vmem [resolvable:$true] %s85
      %s87 = sshll.u32 %s3, 4
      %s88 = int_to_ptr.hbm [resolvable:$true] %s87
      %90 = dma.vmem_to_hbm [thread:$0]  %s86, 32, %s88, [#allocation3]
    $region17: #{tpu_custom_call.1} parent=1 // pred_fallthru
      _
    // Predicated region
    $region18: #{tpu_custom_call.1} parent=1 // pred_check
      _
    $region19: #{tpu_custom_call.1} parent=1 // pred_check_branch
      %92 = sbr.rel (0) target = $region21
    $region20: #{tpu_custom_call.1} parent=1 // pred_region
      %94 = dma.done [#allocation3], 32
    $region21: #{tpu_custom_call.1} parent=1 // pred_fallthru
      _
    %95 = vsyncpa [#allocation3], 1

</llo_original>
